<compile_context>
chip_gen: v7x
topology: tpu7x:2x2x1
jax: 0.10.0
libtpu: 0.0.40
codegen_flags: <defaults>
</compile_context>

<pallas_src>
import numpy as np
import jax
import jax.numpy as jnp
from jax.experimental import pallas as pl
from jax.experimental.pallas import tpu as pltpu


def _make_dropout_kernel(negative_slope):
    def kernel(x_ref, scale_ref, o_ref):
        # x_ref: (rows, hw_block); scale_ref: (rows, 1) f32 -> lane broadcast.
        xf = x_ref[...].astype(jnp.float32)
        if negative_slope is not None:  # fused LeakyReLU (same HBM pass)
            xf = jnp.where(xf >= 0, xf, xf * jnp.float32(negative_slope))
        o_ref[...] = (xf * scale_ref[...]).astype(o_ref.dtype)
    return kernel


def spatial_dropout2d(x, drop_prob, key=None, training=True,
                      negative_slope=None, in_place=True):
    """Pallas equivalent of SpatialDropout2d.forward.  x: (N, C, H, W).

    negative_slope: if not None, applies LeakyReLU(negative_slope) before the
    dropout scaling (fusion of the preceding nonlinearity in ConvBlock).
    """
    if (not training) or drop_prob == 0.0:
        if negative_slope is not None:
            return jnp.where(x >= 0, x, x * jnp.asarray(negative_slope, x.dtype))
        return x
    if key is None:
        key = jax.random.PRNGKey(0)

    N, C, H, W = x.shape
    keep_prob = 1.0 - float(drop_prob)
    NC, HW = N * C, H * W
    itemsize = jnp.dtype(x.dtype).itemsize

    # One Bernoulli(keep_prob) draw per (sample, channel), pre-scaled by
    # 1/keep_prob, kept in f32 so low-precision dtypes never see a rounded
    # scale factor.
    keep = jax.random.bernoulli(key, p=keep_prob, shape=(NC, 1))
    scale = keep.astype(jnp.float32) / jnp.float32(keep_prob)

    # Lane-dense 2-D view (no-copy reshape for contiguous NCHW input).
    x2 = x.reshape(NC, HW)

    # ---- tiling ------------------------------------------------------------
    # Row alignment = native sublane packing: f32 -> 8, bf16 -> 16, int8 -> 32.
    row_align = 8 * max(1, 4 // itemsize)
    target_tile_bytes = 3 << 20  # per pipelined buffer (~12 MiB total w/ 2x2)

    # Lane (H*W) block: full HW if it fits `row_align` rows in the budget,
    # otherwise a multiple of 128 sized against the budget.
    if HW <= 128 or HW * itemsize * row_align <= target_tile_bytes:
        hw_block = HW
    else:
        hw_block = max(128,
                       (target_tile_bytes // (row_align * itemsize)) // 128 * 128)

    # Row (N*C) block: fill the remaining budget, aligned to row_align; a
    # block equal to the full NC dim is always legal.
    rows = (target_tile_bytes // max(hw_block * itemsize, 1)) // row_align * row_align
    rows = max(rows, row_align)
    if rows >= NC:
        rows = NC
    else:
        rows = max(row_align, (rows // row_align) * row_align)

    # Keep >= 2 grid steps when possible so both v7x TensorCores get work.
    if pl.cdiv(NC, rows) * pl.cdiv(HW, hw_block) < 2:
        if NC >= 2 * row_align:
            rows = pl.cdiv(pl.cdiv(NC, 2), row_align) * row_align
        elif HW >= 256:
            hw_block = max(128, (HW // 2) // 128 * 128)

    grid = (pl.cdiv(NC, rows), pl.cdiv(HW, hw_block))

    # VMEM budget: double-buffered in + out tiles plus the (lane-padded) scale.
    tile_bytes = rows * hw_block * itemsize
    scale_tile_bytes = rows * 128 * 4
    vmem_needed = 4 * tile_bytes + 2 * scale_tile_bytes
    vmem_limit = int(min(max(2 * vmem_needed, 16 << 20), 48 << 20))

    flops_per_elem = 1 if negative_slope is None else 2
    out = pl.pallas_call(
        _make_dropout_kernel(negative_slope),
        out_shape=jax.ShapeDtypeStruct((NC, HW), x.dtype),
        grid=grid,
        in_specs=[
            pl.BlockSpec((rows, hw_block), lambda i, j: (i, j)),
            pl.BlockSpec((rows, 1), lambda i, j: (i, 0)),
        ],
        out_specs=pl.BlockSpec((rows, hw_block), lambda i, j: (i, j)),
        input_output_aliases=({0: 0} if in_place else {}),
        compiler_params=pltpu.CompilerParams(
            dimension_semantics=("parallel", "parallel"),
            vmem_limit_bytes=vmem_limit,
        ),
        cost_estimate=pl.CostEstimate(
            flops=flops_per_elem * NC * HW,
            transcendentals=0,
            bytes_accessed=2 * NC * HW * itemsize + NC * 4,
        ),
    )(x2, scale)

    return out.reshape(N, C, H, W)


if __name__ == "__main__":
    key = jax.random.PRNGKey(0)
    kx, kd = jax.random.split(key)
    x = jax.random.normal(kx, (2, 4, 16, 16), dtype=jnp.float32)
    drop_prob = 0.5
    inv_keep = 1.0 / (1.0 - drop_prob)

    ok = True

    # --- plain spatial dropout ---------------------------------------------
    out = jax.block_until_ready(spatial_dropout2d(x, drop_prob, key=kd,
                                                  training=True))
    xn, on = np.asarray(x), np.asarray(out)
    for n in range(xn.shape[0]):
        for c in range(xn.shape[1]):
            sl = on[n, c]
            if not (np.allclose(sl, 0.0)
                    or np.allclose(sl, xn[n, c] * inv_keep,
                                   rtol=1e-6, atol=1e-6)):
                ok = False

    # --- fused LeakyReLU + spatial dropout ----------------------------------
    slope = 0.01
    out_f = jax.block_until_ready(spatial_dropout2d(x, drop_prob, key=kd,
                                                    training=True,
                                                    negative_slope=slope))
    lrelu = np.where(xn >= 0, xn, xn * slope)
    ofn = np.asarray(out_f)
    for n in range(xn.shape[0]):
        for c in range(xn.shape[1]):
            sl = ofn[n, c]
            if not (np.allclose(sl, 0.0)
                    or np.allclose(sl, lrelu[n, c] * inv_keep,
                                   rtol=1e-6, atol=1e-6)):
                ok = False
    # fused and unfused runs must share the same per-channel keep pattern
    ok = ok and np.array_equal(np.abs(on).sum(axis=(2, 3)) > 0,
                               np.abs(ofn).sum(axis=(2, 3)) > 0)

    # --- eval-mode / p == 0 passthrough (PyTorch early-return branch) -------
    out_eval = jax.block_until_ready(
        spatial_dropout2d(x, drop_prob, training=False))
    ok = ok and np.array_equal(np.asarray(out_eval), xn)
    out_p0 = jax.block_until_ready(
        spatial_dropout2d(x, 0.0, key=kd, training=True))
    ok = ok and np.array_equal(np.asarray(out_p0), xn)

    assert ok
    print("KERNEL_OK")
</pallas_src>

<mosaic_0001>
module attributes {stable_mosaic.version = 11 : i64} {
  func.func @kernel(%arg0: i32, %arg1: i32, %arg2: memref<8x128xf32, #tpu.memory_space<vmem>>, %arg3: memref<8x1xf32, #tpu.memory_space<vmem>>, %arg4: memref<8x128xf32, #tpu.memory_space<vmem>>) attributes {dimension_semantics = [#tpu.dimension_semantics<parallel>, #tpu.dimension_semantics<parallel>], iteration_bounds = array<i64: 1, 2>, scalar_prefetch = 0 : i64, scratch_operands = 0 : i64, tpu.core_type = #tpu.core_type<tc>, window_params = [{transform_indices = @transform_0, window_bounds = array<i64: 8, 128>}, {transform_indices = @transform_1, window_bounds = array<i64: 8, 1>}, {transform_indices = @transform_2, window_bounds = array<i64: 8, 128>}]} {
    %c0 = arith.constant 0 : index
    %c0_0 = arith.constant 0 : index
    %0 = vector.load %arg2[%c0, %c0_0] : memref<8x128xf32, #tpu.memory_space<vmem>>, vector<8x128xf32>
    %c0_1 = arith.constant 0 : index
    %c0_2 = arith.constant 0 : index
    %1 = vector.load %arg3[%c0_1, %c0_2] : memref<8x1xf32, #tpu.memory_space<vmem>>, vector<8x1xf32>
    %2 = vector.broadcast %1 : vector<8x1xf32> to vector<8x128xf32>
    %3 = arith.mulf %0, %2 : vector<8x128xf32>
    %c0_3 = arith.constant 0 : index
    %c0_4 = arith.constant 0 : index
    %4 = vector.load %arg4[%c0_3, %c0_4] : memref<8x128xf32, #tpu.memory_space<vmem>>, vector<8x128xf32>
    tpu.vector_store %arg4[%c0_3, %c0_4], %3 {strides = array<i32>} : memref<8x128xf32, #tpu.memory_space<vmem>>, vector<8x128xf32>,
    return
  }
  func.func @transform_0(%arg0: i32, %arg1: i32) -> (i32, i32) {
    %c0_i32 = arith.constant 0 : i32
    return %arg0, %arg1 : i32, i32
  }
  func.func @transform_1(%arg0: i32, %arg1: i32) -> (i32, i32) {
    %c0_i32 = arith.constant 0 : i32
    %c0_i32_0 = arith.constant 0 : i32
    return %arg0, %c0_i32 : i32, i32
  }
  func.func @transform_2(%arg0: i32, %arg1: i32) -> (i32, i32) {
    %c0_i32 = arith.constant 0 : i32
    return %arg0, %arg1 : i32, i32
  }
}

</mosaic_0001>

<llo_original>
// kernel: tpu_custom_call.1
$region0: #{tpu_custom_call.1}
  #allocation0 [shape = 'u32[]', space=smem, size = 0x4, offset = 0x4, fixed_abs, tag = 'smem constant byte address 0x4 - core index']
  #allocation1 [shape = 'u32[144,128]{1,0:T(1,128)}', space=vmem, size = 0x12000, scoped, tag = 'internal scratch']
  %s0 = inlined_call_operand.hbm [shape: f32[8,256], index: 0, kind: input, shape index: {}, may-alias: {0,2}]
  %s1 = inlined_call_operand.vmem [shape: f32[8,1], index: 1, kind: input, shape index: {}]
  %s2 = inlined_call_operand.hbm [shape: f32[8,256], index: 2, kind: output, shape index: {}, may-alias: {0,2}]
  %s3 = sld [smem:[#allocation0]]
  $region45: #{tpu_custom_call.1} parent=0
    _
  %s5 = ssub.s32 1, %s3
  %s6 = scalar_select 0, %s5, %s3
  $region1: #{tpu_custom_call.1} parent=0
    #allocation2 [shape = 'u8[8192]{0}', space=vmem, size = 0x2000, scoped, tag = 'input window, operand 0']
    #allocation3 [shape = 's32[2]{0}', space=sflag, size = 0x8, scoped, tag = 'scoped memory for tpu_custom_call.1']
    #allocation4 [shape = 's32[2]{0}', space=sflag, size = 0x8, scoped, tag = 'scoped memory for tpu_custom_call.1']
    #allocation5 [shape = 'u8[8192]{0}', space=vmem, size = 0x2000, scoped, tag = 'output window, operand 0']
    %7 = vsyncpa [#allocation3], 0
    %s8 = scalar_lea.sflag [#allocation3], 1
    %9 = vsyncpa %s8, 0
    %10 = vsyncpa [#allocation4], 0
    %s11 = scalar_lea.sflag [#allocation4], 1
    %12 = vsyncpa %s11, 0
    loop: start=0, step=1, limit=4
    $region2: #{tpu_custom_call.1} parent=1 // loop_pre_header
      _
    $region3: #{tpu_custom_call.1} parent=1 // loop_header
      %s14 = sphi 0, %s18
      %p15 = scmp.ge.s32.totalorder %s14, 4
      %s21 = sphi 0, %s33
      %s22 = sphi 0, %s29
      %s23 = sphi 0, %s21
      %s24 = sphi 0, %s22
      %s25 = sphi 0, %s23
      %s26 = sphi 0, %s24
      %s38 = sphi 0, %s40
      %s41 = sphi 0, %s38
      %s42 = sphi 0, %s41
      %s58 = sphi 0, %s42
      %s64 = sphi 0, %s66
      %s67 = sphi 0, %s64
      %s68 = sphi 0, %s67
      %s84 = sphi 0, %s68
      %s92 = sphi 0, %s94
      %s95 = sphi 0, %s92
      %s96 = sphi 0, %s95
      %s112 = sphi 0, %s96
    $region4: #{tpu_custom_call.1} parent=1 // loop_header_branch
      %17 = sbr.rel (%p15) target = $region8
    $region5: #{tpu_custom_call.1} parent=1 // loop_body
      %s19 = ssub.s32 %s14, 1
      %s20 = ssub.s32 %s14, 2
      %s27 = sadd.s32 1, %s22
      %p28 = scmp.ge.s32.totalorder %s27, 2
      %s29 = scalar_select %p28, 0, %s27
      %s30 = sadd.s32 1, %s21
      %s31 = scalar_select %p28, %s30, %s21
      %p32 = scmp.ge.s32.totalorder %s31, 1
      %s33 = scalar_select %p32, 0, %s31
      %s34 = ssub.s32 %s21, %s33
      %s35 = ssub.s32 %s22, %s29
      %s36 = sor.u32 %s34, %s35
      %p37 = scmp.eq.s32.totalorder %s36, 0
      %s39 = sadd.s32 %s38, 1
      %s40 = scalar_select %p37, %s38, %s39
      %p43 = pneg %p37
      %p44 = scmp.eq.s32.totalorder %s14, 1
      %p45 = por %p43, %p44
      %p46 = scmp.ne.s32.totalorder %s38, %s41
      %p47 = scmp.eq.s32.totalorder %s14, 0
      %p48 = por %p46, %p47
      %p49 = scmp.ne.s32.totalorder %s38, %s41
      %p50 = scmp.eq.s32.totalorder %s19, 1
      %p51 = por %p49, %p50
      %p52 = scmp.ne.s32.totalorder %s41, %s42
      %p53 = scmp.eq.s32.totalorder %s19, 0
      %p54 = por %p52, %p53
      %p55 = scmp.ne.s32.totalorder %s41, %s42
      %p56 = scmp.eq.s32.totalorder %s20, 1
      %p57 = por %p55, %p56
      %p59 = scmp.ne.s32.totalorder %s42, %s58
      %p60 = scmp.eq.s32.totalorder %s20, 0
      %p61 = por %p59, %p60
      %s62 = ssub.s32 %s21, %s33
      %p63 = scmp.eq.s32.totalorder %s62, 0
      %s65 = sadd.s32 %s64, 1
      %s66 = scalar_select %p63, %s64, %s65
      %p69 = pneg %p63
      %p70 = scmp.eq.s32.totalorder %s14, 1
      %p71 = por %p69, %p70
      %p72 = scmp.ne.s32.totalorder %s64, %s67
      %p73 = scmp.eq.s32.totalorder %s14, 0
      %p74 = por %p72, %p73
      %p75 = scmp.ne.s32.totalorder %s64, %s67
      %p76 = scmp.eq.s32.totalorder %s19, 1
      %p77 = por %p75, %p76
      %p78 = scmp.ne.s32.totalorder %s67, %s68
      %p79 = scmp.eq.s32.totalorder %s19, 0
      %p80 = por %p78, %p79
      %p81 = scmp.ne.s32.totalorder %s67, %s68
      %p82 = scmp.eq.s32.totalorder %s20, 1
      %p83 = por %p81, %p82
      %p85 = scmp.ne.s32.totalorder %s68, %s84
      %p86 = scmp.eq.s32.totalorder %s20, 0
      %p87 = por %p85, %p86
      %s88 = ssub.s32 %s21, %s33
      %s89 = ssub.s32 %s22, %s29
      %s90 = sor.u32 %s88, %s89
      %p91 = scmp.eq.s32.totalorder %s90, 0
      %s93 = sadd.s32 %s92, 1
      %s94 = scalar_select %p91, %s92, %s93
      %p97 = pneg %p91
      %p98 = scmp.eq.s32.totalorder %s14, 1
      %p99 = por %p97, %p98
      %p100 = scmp.ne.s32.totalorder %s92, %s95
      %p101 = scmp.eq.s32.totalorder %s14, 0
      %p102 = por %p100, %p101
      %p103 = scmp.ne.s32.totalorder %s92, %s95
      %p104 = scmp.eq.s32.totalorder %s19, 1
      %p105 = por %p103, %p104
      %p106 = scmp.ne.s32.totalorder %s95, %s96
      %p107 = scmp.eq.s32.totalorder %s19, 0
      %p108 = por %p106, %p107
      %p109 = scmp.ne.s32.totalorder %s95, %s96
      %p110 = scmp.eq.s32.totalorder %s20, 1
      %p111 = por %p109, %p110
      %p113 = scmp.ne.s32.totalorder %s96, %s112
      %p114 = scmp.eq.s32.totalorder %s20, 0
      %p115 = por %p113, %p114
      %p116 = scmp.le.s32.totalorder 1, %s14
      %p117 = scmp.lt.s32.totalorder %s14, 3
      %p118 = pnand %p116, %p117
      %p119 = pneg %p118
      // Predicated region
      $region9: #{tpu_custom_call.1} parent=5 // pred_check
        _
      $region10: #{tpu_custom_call.1} parent=5 // pred_check_branch
        %121 = sbr.rel (%p118) target = $region12
      $region11: #{tpu_custom_call.1} parent=5 // pred_region
        %s122 = ssub.s32 %s14, 1
        // Predicated region
        $region13: #{tpu_custom_call.1} parent=11 // pred_check
          %p123 = pneg %p80
        $region14: #{tpu_custom_call.1} parent=11 // pred_check_branch
          %125 = sbr.rel (%p123) target = $region16
        $region15: #{tpu_custom_call.1} parent=11 // pred_region
          %p126 = scmp.lt.s32.totalorder %s23, 0
          %s127 = scalar_select %p126, %s23, 0
          %s128 = smul.addr %s127, 8
          %s129 = scalar_lea.vmem %s1, %s128
        $region16: #{tpu_custom_call.1} parent=11 // pred_fallthru
          _
      $region12: #{tpu_custom_call.1} parent=5 // pred_fallthru
        _
      %p130 = scmp.lt.s32.totalorder %s14, 2
      // Predicated region
      $region17: #{tpu_custom_call.1} parent=5 // pred_check
        %p131 = pneg %p130
      $region18: #{tpu_custom_call.1} parent=5 // pred_check_branch
        %133 = sbr.rel (%p131) target = $region20
      $region19: #{tpu_custom_call.1} parent=5 // pred_region
        // Predicated region
        $region21: #{tpu_custom_call.1} parent=19 // pred_check
          %p134 = pneg %p48
        $region22: #{tpu_custom_call.1} parent=19 // pred_check_branch
          %136 = sbr.rel (%p134) target = $region24
        $region23: #{tpu_custom_call.1} parent=19 // pred_region
          %s137 = sand.u32 %s38, 1
          %s138 = scalar_lea.sflag [#allocation3], %s137
          %s139 = sand.u32 %s38, 1
          %s140 = smul.addr %s139, 8
          %s141 = scalar_lea.vmem [#allocation2], %s140
          %s143 = ssub.s32 128, 128
          %144 = vsyncadd %s138, %s143
          %s145 = smul.addr %s21, 2
          %s146 = sadd.s32 %s22, %s145
          %s147 = smul.addr %s146, 128
          %s148 = scalar_lea.hbm %s0, %s147
          %s150 = sshll.u32 %s141, 4
          %s151 = int_to_ptr.vmem [resolvable:$true] %s150
          %153 = dma.hbm_to_vmem [thread:$0]  %s148, 128, %s151, %s138
        $region24: #{tpu_custom_call.1} parent=19 // pred_fallthru
          _
      $region20: #{tpu_custom_call.1} parent=5 // pred_fallthru
        _
      %p154 = scmp.le.s32.totalorder 1, %s14
      %p155 = scmp.lt.s32.totalorder %s14, 3
      %p156 = pnand %p154, %p155
      %p157 = pneg %p156
      // Predicated region
      $region25: #{tpu_custom_call.1} parent=5 // pred_check
        _
      $region26: #{tpu_custom_call.1} parent=5 // pred_check_branch
        %159 = sbr.rel (%p156) target = $region28
      $region27: #{tpu_custom_call.1} parent=5 // pred_region
        %s160 = ssub.s32 %s14, 1
        %s161 = sand.u32 %s41, 1
        %s162 = scalar_lea.sflag [#allocation3], %s161
        %s163 = sand.u32 %s41, 1
        %s164 = smul.addr %s163, 8
        %s165 = scalar_lea.vmem [#allocation2], %s164
        // Predicated region
        $region29: #{tpu_custom_call.1} parent=27 // pred_check
          %p166 = pneg %p54
        $region30: #{tpu_custom_call.1} parent=27 // pred_check_branch
          %168 = sbr.rel (%p166) target = $region32
        $region31: #{tpu_custom_call.1} parent=27 // pred_region
          %169 = dma.done %s162, 128
        $region32: #{tpu_custom_call.1} parent=27 // pred_fallthru
          _
        %s170 = sand.u32 %s41, 1
        %s171 = scalar_lea.sflag [#allocation3], %s170
        %s172 = sand.u32 %s41, 1
        %s173 = smul.addr %s172, 8
        %s174 = scalar_lea.vmem [#allocation2], %s173
        %p175 = pneg %p54
        %p176 = pneg %p51
        %p177 = scmp.lt.s32.totalorder %s23, 0
        %s178 = scalar_select %p177, %s23, 0
        %s179 = smul.addr %s178, 8
        %s180 = scalar_lea.vmem %s1, %s179
        %p181 = pneg %p80
        %p182 = pneg %p77
        %p183 = pneg %p108
        %p184 = pneg %p105
        %s185 = sand.u32 %s95, 1
        %s186 = scalar_lea.sflag [#allocation4], %s185
        %s187 = sand.u32 %s95, 1
        %s188 = smul.addr %s187, 8
        %s189 = scalar_lea.vmem [#allocation5], %s188
        %p190 = scmp.lt.s32.totalorder %s23, 0
        %s191 = scalar_select %p190, %s23, 0
        %s192 = smul.addr %s191, 8
        %s193 = scalar_lea.vmem %s1, %s192
        %v194 = vld [vmem:[%s165] sm:$0xff]
        %v195 = vld [vmem:[%s193] sm:$0xff]
        %197 = vset.pattern.permute.xlu0 0
        %198 = vperm.xlu0 %197, %v195
        %v199 = vpop.permute.xlu0 %198
        %v201 = vmul.f32 %v194, %v199
        %202 = vst [vmem:[%s189] sm:$0xff] %v201
        %s203 = sand.u32 %s95, 1
        %s204 = scalar_lea.sflag [#allocation4], %s203
        %s205 = sand.u32 %s95, 1
        %s206 = smul.addr %s205, 8
        %s207 = scalar_lea.vmem [#allocation5], %s206
        // Predicated region
        $region33: #{tpu_custom_call.1} parent=27 // pred_check
          %p208 = pneg %p105
        $region34: #{tpu_custom_call.1} parent=27 // pred_check_branch
          %210 = sbr.rel (%p208) target = $region36
        $region35: #{tpu_custom_call.1} parent=27 // pred_region
          %s212 = ssub.s32 128, 128
          %213 = vsyncadd %s204, %s212
          %s214 = smul.addr %s23, 2
          %s215 = sadd.s32 %s24, %s214
          %s216 = smul.addr %s215, 128
          %s217 = scalar_lea.hbm %s2, %s216
          %s219 = sshll.u32 %s207, 4
          %s220 = int_to_ptr.vmem [resolvable:$true] %s219
          %222 = dma.vmem_to_hbm [thread:$0]  %s220, 128, %s217, %s204
        $region36: #{tpu_custom_call.1} parent=27 // pred_fallthru
          _
      $region28: #{tpu_custom_call.1} parent=5 // pred_fallthru
        _
      %p223 = scmp.le.s32.totalorder 2, %s14
      // Predicated region
      $region37: #{tpu_custom_call.1} parent=5 // pred_check
        %p224 = pneg %p223
      $region38: #{tpu_custom_call.1} parent=5 // pred_check_branch
        %226 = sbr.rel (%p224) target = $region40
      $region39: #{tpu_custom_call.1} parent=5 // pred_region
        %s227 = ssub.s32 %s14, 2
        // Predicated region
        $region41: #{tpu_custom_call.1} parent=39 // pred_check
          %p228 = pneg %p111
        $region42: #{tpu_custom_call.1} parent=39 // pred_check_branch
          %230 = sbr.rel (%p228) target = $region44
        $region43: #{tpu_custom_call.1} parent=39 // pred_region
          %s231 = sand.u32 %s96, 1
          %s232 = scalar_lea.sflag [#allocation4], %s231
          %s233 = sand.u32 %s96, 1
          %s234 = smul.addr %s233, 8
          %s235 = scalar_lea.vmem [#allocation5], %s234
          %236 = dma.done %s232, 128
        $region44: #{tpu_custom_call.1} parent=39 // pred_fallthru
          _
      $region40: #{tpu_custom_call.1} parent=5 // pred_fallthru
        _
    $region6: #{tpu_custom_call.1} parent=1 // loop_footer
      %s18 = sadd.s32 1, %s14
    $region7: #{tpu_custom_call.1} parent=1 // loop_footer_branch
      %13 = sbr.rel target = $region3
    $region8: #{tpu_custom_call.1} parent=1 // loop_exit
      _
    %237 = vsyncpa [#allocation3], 1
    %s238 = scalar_lea.sflag [#allocation3], 1
    %239 = vsyncpa %s238, 1
    %240 = vsyncpa [#allocation4], 1
    %s241 = scalar_lea.sflag [#allocation4], 1
    %242 = vsyncpa %s241, 1

</llo_original>
